<compile_context>
chip_gen: v7x
topology: tpu7x:2x2x1
jax: 0.10.0
libtpu: 0.0.40
codegen_flags: <defaults>
</compile_context>

<pallas_src>
import functools
import math

import jax
import jax.numpy as jnp
from jax.experimental import pallas as pl
from jax.experimental.pallas import tpu as pltpu


def _int_pow(x, n):
    """x**n for small non-negative integer n via square-and-multiply (VPU only)."""
    if n == 0:
        return jnp.ones_like(x)
    acc = None
    base = x
    while n:
        if n & 1:
            acc = base if acc is None else acc * base
        n >>= 1
        if n:
            base = base * base
    return acc


def _focal_loss_kernel(alpha, gamma, gamma_int, logits_ref, target_ref, out_ref):
    x = logits_ref[...].astype(jnp.float32)
    t = target_ref[...].astype(jnp.float32)

    # Shared transcendental: e = exp(-|x|) feeds sigmoid-like terms and the BCE.
    e = jnp.exp(-jnp.abs(x))                       # EUP
    one_plus_e = 1.0 + e
    r = 1.0 / one_plus_e                           # exact f32 reciprocal

    # q = 1 - pt, where pt = sigmoid(x) if t == 1 else 1 - sigmoid(x).
    #   t==1: q = sigmoid(-x) = (e if x>=0 else 1) * r
    #   t!=1: q = sigmoid(+x) = (1 if x>=0 else e) * r
    # => pick e exactly when (t == 1) == (x >= 0), i.e. xor(t == 1, x < 0).
    take_e = jnp.logical_xor(t == 1.0, x < 0.0)
    q = r * jnp.where(take_e, e, 1.0)

    # Stable binary_cross_entropy_with_logits(x, t) = max(x,0) - x*t + log(1+e).
    ce = jnp.maximum(x, 0.0) - x * t + jnp.log(one_plus_e)   # EUP (log)

    # alpha_t = t*alpha + (1-t)*(1-alpha), folded to 1 mul + 1 add.
    alpha_t = (1.0 - alpha) + t * (2.0 * alpha - 1.0)

    if gamma_int is not None:
        mod = _int_pow(q, gamma_int)               # VPU multiplies only
    else:
        # Non-integer gamma fallback: q**gamma = exp(gamma * log(q)); q > 0 for
        # finite logits in f32 (underflow of e only for |x| > ~88).
        mod = jnp.exp(gamma * jnp.log(q))

    out_ref[...] = (alpha_t * mod * ce).astype(out_ref.dtype)


def _focal_elementwise_jnp(x, t, alpha, gamma):
    """Plain-jnp tail path (only used when total % 128 != 0, tail < 128 elems)."""
    x = x.astype(jnp.float32)
    t = t.astype(jnp.float32)
    e = jnp.exp(-jnp.abs(x))
    r = 1.0 / (1.0 + e)
    q = r * jnp.where(jnp.logical_xor(t == 1.0, x < 0.0), e, 1.0)
    ce = jnp.maximum(x, 0.0) - x * t + jnp.log1p(e)
    alpha_t = (1.0 - alpha) + t * (2.0 * alpha - 1.0)
    return alpha_t * jnp.power(q, gamma) * ce


# All operands (2 in + 1 out), one pipeline stage. Double-buffered this is
# ~24 MiB resident: fits the scoped-VMEM limit below on v5e/v6e/v7x.
_TARGET_STEP_BYTES = 12 * 1024 * 1024
_VMEM_LIMIT_BYTES = 48 << 20   # > 24 MiB usage, < v7x 64 MiB physical per TC


def focal_loss(pred_logits, target, alpha=0.25, gamma=2.0):
    assert pred_logits.shape == target.shape
    orig_shape = pred_logits.shape
    out_dtype = pred_logits.dtype
    total = math.prod(orig_shape) if orig_shape else 1
    if total == 0:
        return jnp.zeros(orig_shape, out_dtype)

    alpha_f = float(alpha)
    gamma_f = float(gamma)
    gamma_int = int(gamma_f) if gamma_f.is_integer() and 0 <= gamma_f <= 8 else None

    x_flat = jnp.reshape(pred_logits, (-1,))
    t_flat = jnp.reshape(target, (-1,))

    # Widest lane-dense width that divides the element count -> free reshape view.
    lane = 128
    for cand in (1024, 512, 256, 128):
        if total % cand == 0:
            lane = cand
            break
    bulk = (total // lane) * lane    # == total unless total % 128 != 0
    tail = total - bulk              # < 128

    pieces = []
    if bulk > 0:
        rows = bulk // lane
        if bulk == total:
            x2 = jnp.reshape(x_flat, (rows, lane))
            t2 = jnp.reshape(t_flat, (rows, lane))
        else:
            x2 = jnp.reshape(x_flat[:bulk], (rows, lane))
            t2 = jnp.reshape(t_flat[:bulk], (rows, lane))

        # Block sizing by real itemsizes (~4 MiB/operand for f32 at lane=1024).
        bytes_per_row = lane * (x2.dtype.itemsize + t2.dtype.itemsize
                                + jnp.dtype(out_dtype).itemsize)
        target_rows = max(8, (_TARGET_STEP_BYTES // bytes_per_row) // 8 * 8)

        if rows <= 8:
            block_rows = rows                      # single full-extent block (tiny input)
        else:
            # Aim for >= ~4 grid steps (DMA/compute overlap, v7x megacore),
            # capped at target_rows; keep block_rows a multiple of 8.
            quarter = ((pl.cdiv(rows, 4) + 7) // 8) * 8
            block_rows = max(8, min(target_rows, quarter))
        grid = (pl.cdiv(rows, block_rows),)        # partial last block ok (elementwise)

        kernel = functools.partial(_focal_loss_kernel, alpha_f, gamma_f, gamma_int)
        out2 = pl.pallas_call(
            kernel,
            out_shape=jax.ShapeDtypeStruct((rows, lane), out_dtype),
            grid=grid,
            in_specs=[
                pl.BlockSpec((block_rows, lane), lambda i: (i, 0)),
                pl.BlockSpec((block_rows, lane), lambda i: (i, 0)),
            ],
            out_specs=pl.BlockSpec((block_rows, lane), lambda i: (i, 0)),
            compiler_params=pltpu.CompilerParams(
                dimension_semantics=("parallel",),
                vmem_limit_bytes=_VMEM_LIMIT_BYTES,
            ),
        )(x2, t2)
        pieces.append(jnp.reshape(out2, (-1,)))

    if tail > 0:
        # TODO(synk): fold the <128-element tail into the last kernel block via a
        # scalar-prefetch valid-count mask to avoid this concatenate entirely.
        tail_out = _focal_elementwise_jnp(x_flat[bulk:], t_flat[bulk:], alpha_f, gamma_f)
        pieces.append(tail_out.astype(out_dtype))

    out_flat = pieces[0] if len(pieces) == 1 else jnp.concatenate(pieces)
    return jnp.reshape(out_flat, orig_shape)


def focal_loss_ref(pred_logits, target, alpha=0.25, gamma=2.0):
    x = pred_logits.astype(jnp.float32)
    t = target.astype(jnp.float32)
    pred = jax.nn.sigmoid(x)
    ce = jnp.maximum(x, 0.0) - x * t + jnp.log1p(jnp.exp(-jnp.abs(x)))
    alpha_t = t * alpha + (1.0 - t) * (1.0 - alpha)
    pt = jnp.where(t == 1.0, pred, 1.0 - pred)
    return (alpha_t * jnp.power(1.0 - pt, gamma) * ce).astype(pred_logits.dtype)


if __name__ == "__main__":
    key = jax.random.PRNGKey(0)
    k1, k2 = jax.random.split(key)

    # NCHW inputs consistent with typical FocalLoss usage.
    shape = (2, 4, 16, 16)
    pred_logits = jax.random.normal(k1, shape, dtype=jnp.float32) * 2.0
    target = (jax.random.uniform(k2, shape) > 0.5).astype(jnp.float32)

    out = focal_loss(pred_logits, target, alpha=0.25, gamma=2.0)
    out = jax.block_until_ready(out)

    ref = focal_loss_ref(pred_logits, target, alpha=0.25, gamma=2.0)
    assert out.shape == shape
    assert jnp.allclose(out, ref, atol=1e-5, rtol=1e-5), "mismatch vs reference"

    print("KERNEL_OK")
</pallas_src>

<mosaic_0001>
module attributes {stable_mosaic.version = 11 : i64} {
  func.func @_focal_loss_kernel(%arg0: i32, %arg1: memref<2x1024xf32, #tpu.memory_space<vmem>>, %arg2: memref<2x1024xf32, #tpu.memory_space<vmem>>, %arg3: memref<2x1024xf32, #tpu.memory_space<vmem>>) attributes {dimension_semantics = [#tpu.dimension_semantics<parallel>], iteration_bounds = array<i64: 1>, scalar_prefetch = 0 : i64, scratch_operands = 0 : i64, tpu.core_type = #tpu.core_type<tc>, window_params = [{transform_indices = @transform_0, window_bounds = array<i64: 2, 1024>}, {transform_indices = @transform_1, window_bounds = array<i64: 2, 1024>}, {transform_indices = @transform_2, window_bounds = array<i64: 2, 1024>}]} {
    %c0 = arith.constant 0 : index
    %c0_0 = arith.constant 0 : index
    %0 = vector.load %arg1[%c0, %c0_0] : memref<2x1024xf32, #tpu.memory_space<vmem>>, vector<2x1024xf32>
    %c0_1 = arith.constant 0 : index
    %c0_2 = arith.constant 0 : index
    %1 = vector.load %arg2[%c0_1, %c0_2] : memref<2x1024xf32, #tpu.memory_space<vmem>>, vector<2x1024xf32>
    %2 = math.absf %0 : vector<2x1024xf32>
    %cst = arith.constant 0.000000e+00 : f32
    %3 = vector.broadcast %cst : f32 to vector<2x1024xf32>
    %4 = arith.subf %3, %2 : vector<2x1024xf32>
    %5 = math.exp %4 : vector<2x1024xf32>
    %cst_3 = arith.constant 1.000000e+00 : f32
    %6 = vector.broadcast %cst_3 : f32 to vector<2x1024xf32>
    %7 = arith.addf %6, %5 : vector<2x1024xf32>
    %cst_4 = arith.constant 1.000000e+00 : f32
    %8 = vector.broadcast %cst_4 : f32 to vector<2x1024xf32>
    %9 = arith.divf %8, %7 : vector<2x1024xf32>
    %cst_5 = arith.constant 1.000000e+00 : f32
    %10 = vector.broadcast %cst_5 : f32 to vector<2x1024xf32>
    %11 = arith.cmpf oeq, %1, %10 : vector<2x1024xf32>
    %cst_6 = arith.constant 0.000000e+00 : f32
    %12 = vector.broadcast %cst_6 : f32 to vector<2x1024xf32>
    %13 = arith.cmpf olt, %0, %12 : vector<2x1024xf32>
    %14 = arith.xori %11, %13 : vector<2x1024xi1>
    %cst_7 = arith.constant 1.000000e+00 : f32
    %15 = vector.broadcast %cst_7 : f32 to vector<2x1024xf32>
    %16 = arith.select %14, %5, %15 : vector<2x1024xi1>, vector<2x1024xf32>
    %17 = arith.mulf %9, %16 : vector<2x1024xf32>
    %cst_8 = arith.constant 0.000000e+00 : f32
    %18 = vector.broadcast %cst_8 : f32 to vector<2x1024xf32>
    %19 = arith.maximumf %0, %18 : vector<2x1024xf32>
    %20 = arith.mulf %0, %1 : vector<2x1024xf32>
    %21 = arith.subf %19, %20 : vector<2x1024xf32>
    %22 = math.log %7 : vector<2x1024xf32>
    %23 = arith.addf %21, %22 : vector<2x1024xf32>
    %cst_9 = arith.constant -5.000000e-01 : f32
    %24 = vector.broadcast %cst_9 : f32 to vector<2x1024xf32>
    %25 = arith.mulf %1, %24 : vector<2x1024xf32>
    %cst_10 = arith.constant 7.500000e-01 : f32
    %26 = vector.broadcast %cst_10 : f32 to vector<2x1024xf32>
    %27 = arith.addf %26, %25 : vector<2x1024xf32>
    %28 = arith.mulf %17, %17 : vector<2x1024xf32>
    %29 = arith.mulf %27, %28 : vector<2x1024xf32>
    %30 = arith.mulf %29, %23 : vector<2x1024xf32>
    %c0_11 = arith.constant 0 : index
    %c0_12 = arith.constant 0 : index
    %31 = vector.load %arg3[%c0_11, %c0_12] : memref<2x1024xf32, #tpu.memory_space<vmem>>, vector<2x1024xf32>
    tpu.vector_store %arg3[%c0_11, %c0_12], %30 {strides = array<i32>} : memref<2x1024xf32, #tpu.memory_space<vmem>>, vector<2x1024xf32>,
    return
  }
  func.func @transform_0(%arg0: i32) -> (i32, i32) {
    %c0_i32 = arith.constant 0 : i32
    %c0_i32_0 = arith.constant 0 : i32
    return %arg0, %c0_i32 : i32, i32
  }
  func.func @transform_1(%arg0: i32) -> (i32, i32) {
    %c0_i32 = arith.constant 0 : i32
    %c0_i32_0 = arith.constant 0 : i32
    return %arg0, %c0_i32 : i32, i32
  }
  func.func @transform_2(%arg0: i32) -> (i32, i32) {
    %c0_i32 = arith.constant 0 : i32
    %c0_i32_0 = arith.constant 0 : i32
    return %arg0, %c0_i32 : i32, i32
  }
}

</mosaic_0001>

<llo_original>
// kernel: tpu_custom_call.1
$region0: #{tpu_custom_call.1}
  #allocation0 [shape = 'u32[]', space=smem, size = 0x4, offset = 0x4, fixed_abs, tag = 'smem constant byte address 0x4 - core index']
  #allocation1 [shape = 'u32[144,128]{1,0:T(1,128)}', space=vmem, size = 0x12000, scoped, tag = 'internal scratch']
  %s0 = inlined_call_operand.hbm [shape: f32[2,1024], index: 0, kind: input, shape index: {}]
  %s1 = inlined_call_operand.hbm [shape: f32[2,1024], index: 1, kind: input, shape index: {}]
  %s2 = inlined_call_operand.hbm [shape: f32[2,1024], index: 2, kind: output, shape index: {}]
  %s3 = sld [smem:[#allocation0]]
  $region26: #{tpu_custom_call.1} parent=0
    _
  %s5 = ssub.s32 1, %s3
  %s6 = scalar_select 0, %s5, %s3
  $region1: #{tpu_custom_call.1} parent=0
    #allocation2 [shape = 'u8[8192]{0}', space=vmem, size = 0x2000, scoped, tag = 'input window, operand 0, single buffered']
    #allocation3 [shape = 's32[1]{0}', space=sflag, size = 0x4, scoped, tag = 'scoped memory for tpu_custom_call.1']
    #allocation4 [shape = 's32[1]{0}', space=sflag, size = 0x4, scoped, tag = 'scoped memory for tpu_custom_call.1']
    #allocation5 [shape = 'u8[8192]{0}', space=vmem, size = 0x2000, scoped, tag = 'input window, operand 1, single buffered']
    #allocation6 [shape = 's32[1]{0}', space=sflag, size = 0x4, scoped, tag = 'scoped memory for tpu_custom_call.1']
    #allocation7 [shape = 'u8[8192]{0}', space=vmem, size = 0x2000, scoped, tag = 'output window, operand 0, single buffered']
    %7 = vsyncpa [#allocation3], 0
    %8 = vsyncpa [#allocation6], 0
    %9 = vsyncpa [#allocation4], 0
    // Predicated region
    $region2: #{tpu_custom_call.1} parent=1 // pred_check
      _
    $region3: #{tpu_custom_call.1} parent=1 // pred_check_branch
      %11 = sbr.rel (0) target = $region5
    $region4: #{tpu_custom_call.1} parent=1 // pred_region
      %s13 = ssub.s32 256, 256
      %14 = vsyncadd [#allocation3], %s13
      %s16 = sshll.u32 [#allocation2], 4
      %s17 = int_to_ptr.vmem [resolvable:$true] %s16
      %19 = dma.hbm_to_vmem [thread:$0]  %s0, 256, %s17, [#allocation3]
    $region5: #{tpu_custom_call.1} parent=1 // pred_fallthru
      _
    // Predicated region
    $region6: #{tpu_custom_call.1} parent=1 // pred_check
      _
    $region7: #{tpu_custom_call.1} parent=1 // pred_check_branch
      %21 = sbr.rel (0) target = $region9
    $region8: #{tpu_custom_call.1} parent=1 // pred_region
      %s23 = ssub.s32 256, 256
      %24 = vsyncadd [#allocation6], %s23
      %s26 = sshll.u32 [#allocation5], 4
      %s27 = int_to_ptr.vmem [resolvable:$true] %s26
      %29 = dma.hbm_to_vmem [thread:$0]  %s1, 256, %s27, [#allocation6]
    $region9: #{tpu_custom_call.1} parent=1 // pred_fallthru
      _
    // Predicated region
    $region10: #{tpu_custom_call.1} parent=1 // pred_check
      _
    $region11: #{tpu_custom_call.1} parent=1 // pred_check_branch
      %31 = sbr.rel (0) target = $region13
    $region12: #{tpu_custom_call.1} parent=1 // pred_region
      %32 = dma.done [#allocation3], 256
    $region13: #{tpu_custom_call.1} parent=1 // pred_fallthru
      _
    // Predicated region
    $region14: #{tpu_custom_call.1} parent=1 // pred_check
      _
    $region15: #{tpu_custom_call.1} parent=1 // pred_check_branch
      %34 = sbr.rel (0) target = $region17
    $region16: #{tpu_custom_call.1} parent=1 // pred_region
      %35 = dma.done [#allocation6], 256
    $region17: #{tpu_custom_call.1} parent=1 // pred_fallthru
      _
    %v36 = vld [vmem:[#allocation2] sm:$0xff]
    %v37 = vld [vmem:[#allocation2 + $0x8] sm:$0xff]
    %v38 = vld [vmem:[#allocation5] sm:$0xff]
    %v39 = vld [vmem:[#allocation5 + $0x8] sm:$0xff]
    %v40 = vand.u32 2147483647, %v36
    %v41 = vand.u32 2147483647, %v37
    %v42 = vsub.f32 0.0, %v40
    %v43 = vsub.f32 0.0, %v41
    %v44 = vmul.f32 %v42, 1.442695
    %v45 = vpow.pop %v44
    %v46 = vmul.f32 %v43, 1.442695
    %v47 = vpow.pop %v46
    %v48 = vadd.f32 %v45, 1.0
    %v49 = vadd.f32 %v47, 1.0
    %v50 = vrcp.pop %v48
    %v51 = vmul.f32 1.0, %v50
    %v52 = vrcp.pop %v49
    %v53 = vmul.f32 1.0, %v52
    %vm54 = vcmp.eq.f32.partialorder %v38, 1.0
    %vm55 = vcmp.eq.f32.partialorder %v39, 1.0
    %vm56 = vcmp.lt.f32.partialorder %v36, 0.0
    %vm57 = vcmp.lt.f32.partialorder %v37, 0.0
    %vm58 = vmxor %vm54, %vm56
    %vm59 = vmxor %vm55, %vm57
    %v60 = vsel %vm58, %v45, 1.0
    %v61 = vsel %vm59, %v47, 1.0
    %v62 = vmul.f32 %v51, %v60
    %v63 = vmul.f32 %v53, %v61
    %v64 = vmax.f32 %v36, 0.0
    %v65 = vmax.f32 %v37, 0.0
    %v66 = vmul.f32 %v36, %v38
    %v67 = vmul.f32 %v37, %v39
    %v68 = vsub.f32 %v64, %v66
    %v69 = vsub.f32 %v65, %v67
    %v70 = vlog2.pop %v48
    %v71 = vmul.f32 %v70, 0.6931472
    %v72 = vlog2.pop %v49
    %v73 = vmul.f32 %v72, 0.6931472
    %v74 = vadd.f32 %v68, %v71
    %v75 = vadd.f32 %v69, %v73
    %v76 = vmul.f32 %v38, -0.5
    %v77 = vmul.f32 %v39, -0.5
    %v78 = vadd.f32 %v76, 0.75
    %v79 = vadd.f32 %v77, 0.75
    %v80 = vmul.f32 %v62, %v62
    %v81 = vmul.f32 %v63, %v63
    %v82 = vmul.f32 %v78, %v80
    %v83 = vmul.f32 %v79, %v81
    %v84 = vmul.f32 %v82, %v74
    %v85 = vmul.f32 %v83, %v75
    %86 = vst [vmem:[#allocation7] sm:$0xff] %v84
    %87 = vst [vmem:[#allocation7 + $0x8] sm:$0xff] %v85
    // Predicated region
    $region18: #{tpu_custom_call.1} parent=1 // pred_check
      _
    $region19: #{tpu_custom_call.1} parent=1 // pred_check_branch
      %89 = sbr.rel (0) target = $region21
    $region20: #{tpu_custom_call.1} parent=1 // pred_region
      %s91 = ssub.s32 256, 256
      %92 = vsyncadd [#allocation4], %s91
      %s94 = sshll.u32 [#allocation7], 4
      %s95 = int_to_ptr.vmem [resolvable:$true] %s94
      %97 = dma.vmem_to_hbm [thread:$0]  %s95, 256, %s2, [#allocation4]
    $region21: #{tpu_custom_call.1} parent=1 // pred_fallthru
      _
    // Predicated region
    $region22: #{tpu_custom_call.1} parent=1 // pred_check
      _
    $region23: #{tpu_custom_call.1} parent=1 // pred_check_branch
      %99 = sbr.rel (0) target = $region25
    $region24: #{tpu_custom_call.1} parent=1 // pred_region
      %100 = dma.done [#allocation4], 256
    $region25: #{tpu_custom_call.1} parent=1 // pred_fallthru
      _
    %101 = vsyncpa [#allocation3], 1
    %102 = vsyncpa [#allocation6], 1
    %103 = vsyncpa [#allocation4], 1

</llo_original>
